<compile_context>
chip_gen: v7x
topology: tpu7x:2x2x1
jax: 0.10.0
libtpu: 0.0.40
codegen_flags: <defaults>
</compile_context>

<pallas_src>
import functools

import jax
import jax.numpy as jnp
from jax import lax
from jax.experimental import pallas as pl
from jax.experimental.pallas import tpu as pltpu


# Packed parameter slab layout (single [104,128] f32 VMEM buffer, PyTorch [out,in]):
#   rows  0:64 , cols 0:8   -> W1 (Linear(4,64)), K padded 4->8 with zeros
#   rows  0:64 , col  8     -> b1
#   rows 64:96 , cols 0:64  -> W2 (Linear(64,32))     rows 64:96 , col 64 -> b2
#   rows 96:99 , cols 0:32  -> Wh (rows 0,1: action head; row 2: value head)
#   rows 96:99 , col  32    -> bh
_SLAB_ROWS = 104
_SLAB_COLS = 128


def _mlp_heads(state_ref, params_ref):
    """Shared feature-major MLP + fused head matmul. Returns z = [3, tile_B]."""
    w1 = params_ref[0:64, 0:8]          # [64, 8]  (cols 4:8 are zero padding)
    b1 = params_ref[0:64, 8:9]          # [64, 1]
    w2 = params_ref[64:96, 0:64]        # [32, 64]
    b2 = params_ref[64:96, 64:65]       # [32, 1]
    wh = params_ref[96:99, 0:32]        # [3, 32]
    bh = params_ref[96:99, 32:33]       # [3, 1]

    x = state_ref[...]                                                       # [8, T]
    h1 = jnp.maximum(jnp.dot(w1, x, preferred_element_type=jnp.float32) + b1, 0.0)
    h2 = jnp.maximum(jnp.dot(w2, h1, preferred_element_type=jnp.float32) + b2, 0.0)
    return jnp.dot(wh, h2, preferred_element_type=jnp.float32) + bh          # [3, T]


def _head_outputs(z, lse, act):
    """Softmax(dim=0) via full-batch lse + Categorical renorm -> packed [3,T] result."""
    shifted = z[0:2, :] - lse                             # [2, T] log of dim-0 softmax
    s0 = shifted[0:1, :]
    s1 = shifted[1:2, :]
    row_m = jnp.maximum(s0, s1)
    e0 = jnp.exp(s0 - row_m)
    e1 = jnp.exp(s1 - row_m)
    denom = e0 + e1
    row_lse = row_m + jnp.log(denom)                      # Categorical renorm (log space)
    lp0 = s0 - row_lse
    lp1 = s1 - row_lse
    inv = pl.reciprocal(denom, approx=False)              # exact: keep 2e-5 parity
    p0 = e0 * inv
    p1 = e1 * inv
    lp_taken = jnp.where(act == 1, lp1, lp0)              # A=2 select, no onehot
    entropy = -(jnp.where(p0 > 0, p0 * lp0, 0.0) + jnp.where(p1 > 0, p1 * lp1, 0.0))
    # One packed [3,T] store: row0=logprob(action), row1=value, row2=entropy.
    return jnp.concatenate([lp_taken, z[2:3, :], entropy], axis=0)


def _lse_z_kernel(state_ref, params_ref, lse_ref, z_ref, m_scr, s_scr, *, total_rows):
    """Phase 0: per-action batch logsumexp (Softmax(dim=0) stats) + emit z."""
    i = pl.program_id(0)
    tile = state_ref.shape[1]
    last = pl.num_programs(0) - 1

    @pl.when(i == 0)
    def _():
        m_scr[...] = jnp.full_like(m_scr, -jnp.inf)
        s_scr[...] = jnp.zeros_like(s_scr)

    z = _mlp_heads(state_ref, params_ref)                 # [3, T]
    z_ref[...] = z                                        # hand off to phase 1
    logits = z[0:2, :]                                    # [2, T]

    @pl.when(i < last)
    def _():
        # Interior tiles are fully valid: unmasked online update.
        new_m = jnp.maximum(m_scr[...], jnp.max(logits, axis=1, keepdims=True))
        s_scr[...] = (s_scr[...] * jnp.exp(m_scr[...] - new_m)
                      + jnp.sum(jnp.exp(logits - new_m), axis=1, keepdims=True))
        m_scr[...] = new_m

    @pl.when(i == last)
    def _():
        # Only the final tile can contain padded batch columns: mask + finalize.
        col = i * tile + lax.broadcasted_iota(jnp.int32, (1, tile), 1)
        valid = col < total_rows
        masked = jnp.where(valid, logits, -jnp.inf)
        new_m = jnp.maximum(m_scr[...], jnp.max(masked, axis=1, keepdims=True))
        p = jnp.where(valid, jnp.exp(logits - new_m), 0.0)
        s_scr[...] = (s_scr[...] * jnp.exp(m_scr[...] - new_m)
                      + jnp.sum(p, axis=1, keepdims=True))
        m_scr[...] = new_m
        lse_ref[...] = m_scr[...] + jnp.log(s_scr[...])   # [2, 1]


def _outputs_kernel(lse_ref, z_ref, action_ref, out_ref):
    """Phase 1: pure VPU/EUP head math over the precomputed z. One packed store."""
    out_ref[...] = _head_outputs(z_ref[...], lse_ref[...], action_ref[...])


def _fused_kernel(state_ref, action_ref, params_ref, out_ref, *, total_rows):
    """Fast path (batch fits one tile): full evaluate in a single kernel."""
    z = _mlp_heads(state_ref, params_ref)                 # [3, T]
    logits = z[0:2, :]
    tile = logits.shape[1]
    if total_rows < tile:
        col = lax.broadcasted_iota(jnp.int32, (1, tile), 1)
        valid = col < total_rows
        masked = jnp.where(valid, logits, -jnp.inf)
        m = jnp.max(masked, axis=1, keepdims=True)
        s = jnp.sum(jnp.where(valid, jnp.exp(logits - m), 0.0), axis=1, keepdims=True)
    else:
        m = jnp.max(logits, axis=1, keepdims=True)
        s = jnp.sum(jnp.exp(logits - m), axis=1, keepdims=True)
    lse = m + jnp.log(s)                                  # [2, 1]
    out_ref[...] = _head_outputs(z, lse, action_ref[...])


def pack_params(p):
    """Pack the 8 PyTorch-layout ([out,in]) tensors into one [104,128] f32 slab."""
    wh = jnp.concatenate([p["wa"], p["wv"]], axis=0)      # [3, 32]
    bh = jnp.concatenate([p["ba"], p["bv"]], axis=0)      # [3]
    slab = jnp.zeros((_SLAB_ROWS, _SLAB_COLS), jnp.float32)
    slab = slab.at[0:64, 0:4].set(p["w1"])                # cols 4:8 stay zero (K pad)
    slab = slab.at[0:64, 8].set(p["b1"])
    slab = slab.at[64:96, 0:64].set(p["w2"])
    slab = slab.at[64:96, 64].set(p["b2"])
    slab = slab.at[96:99, 0:32].set(wh)
    slab = slab.at[96:99, 32].set(bh)
    return slab


def actor_critic_evaluate(state, action, params, *, tile_b=16384):
    """Returns (action_logprobs[B], state_value[B], dist_entropy[B])."""
    assert tile_b % 128 == 0
    # v7x has only 64 MiB physical VMEM: clamp the lane tile so the [64,T]/[32,T]
    # temporaries plus double-buffered IO stay ~15-22 MB on every generation.
    tile_b = min(tile_b, 32768)
    B = state.shape[0]
    tile = min(tile_b, 128 * pl.cdiv(B, 128))
    nb = pl.cdiv(B, tile)
    B_pad = nb * tile

    # Feature-major feed [8, B_pad]: batch along lanes (lane-dense head math/stores),
    # features padded 4->8 so state loads are full (8,128)-tile vlds. The cast +
    # transpose + pad of the tiny [B,4] state fuse into a single XLA copy; a
    # batch-major (tile,4) block inside the kernel would waste 32x VMEM to lane pad.
    state_fm = jnp.pad(state.astype(jnp.float32).T, ((0, 4), (0, B_pad - B)))
    action_fm = jnp.pad(action.astype(jnp.int32), (0, B_pad - B)).reshape(1, B_pad)
    slab = pack_params(params)

    # Permissive limit (not a reservation); actual use is well under it and under
    # v7x's 64 MiB physical VMEM.
    vmem_cap = 48 * 1024 * 1024

    if nb == 1:
        # Fast path: one kernel, no lse HBM round trip, no duplicated MLP work.
        out = pl.pallas_call(
            functools.partial(_fused_kernel, total_rows=B),
            out_shape=jax.ShapeDtypeStruct((3, B_pad), jnp.float32),
            grid=(1,),
            in_specs=[pl.BlockSpec((8, B_pad), lambda i: (0, 0)),
                      pl.BlockSpec((1, B_pad), lambda i: (0, 0)),
                      pl.BlockSpec((_SLAB_ROWS, _SLAB_COLS), lambda i: (0, 0))],
            out_specs=pl.BlockSpec((3, B_pad), lambda i: (0, 0)),
            compiler_params=pltpu.CompilerParams(
                dimension_semantics=("arbitrary",), vmem_limit_bytes=vmem_cap),
        )(state_fm, action_fm, slab)
        return out[0, :B], out[1, :B], out[2, :B]

    state_spec = pl.BlockSpec((8, tile), lambda i: (0, i))
    params_spec = pl.BlockSpec((_SLAB_ROWS, _SLAB_COLS), lambda i: (0, 0))  # resident
    lse_spec = pl.BlockSpec((2, 1), lambda i: (0, 0))
    z_spec = pl.BlockSpec((3, tile), lambda i: (0, i))

    # Phase 0: sequential online reduction over the batch axis; also emits z.
    lse, z = pl.pallas_call(
        functools.partial(_lse_z_kernel, total_rows=B),
        out_shape=(jax.ShapeDtypeStruct((2, 1), jnp.float32),
                   jax.ShapeDtypeStruct((3, B_pad), jnp.float32)),
        grid=(nb,),
        in_specs=[state_spec, params_spec],
        out_specs=(lse_spec, z_spec),
        scratch_shapes=[pltpu.VMEM((2, 1), jnp.float32),
                        pltpu.VMEM((2, 1), jnp.float32)],
        compiler_params=pltpu.CompilerParams(
            dimension_semantics=("arbitrary",), vmem_limit_bytes=vmem_cap),
    )(state_fm, slab)

    # Phase 1: pure streaming head math, parallel over batch tiles (both TCs on v7x).
    out = pl.pallas_call(
        _outputs_kernel,
        out_shape=jax.ShapeDtypeStruct((3, B_pad), jnp.float32),
        grid=(nb,),
        in_specs=[lse_spec, z_spec, pl.BlockSpec((1, tile), lambda i: (0, i))],
        out_specs=pl.BlockSpec((3, tile), lambda i: (0, i)),
        compiler_params=pltpu.CompilerParams(
            dimension_semantics=("parallel",), vmem_limit_bytes=vmem_cap),
    )(lse, z, action_fm)

    return out[0, :B], out[1, :B], out[2, :B]


def init_params(key):
    """Deterministic init matching PyTorch nn.Linear shapes ([out, in] weights)."""
    def linear(k, fan_in, fan_out):
        kw, kb = jax.random.split(k)
        bound = 1.0 / jnp.sqrt(fan_in)
        w = jax.random.uniform(kw, (fan_out, fan_in), jnp.float32, -bound, bound)
        b = jax.random.uniform(kb, (fan_out,), jnp.float32, -bound, bound)
        return w, b

    k1, k2, k3, k4 = jax.random.split(key, 4)
    w1, b1 = linear(k1, 4, 64)
    w2, b2 = linear(k2, 64, 32)
    wa, ba = linear(k3, 32, 2)
    wv, bv = linear(k4, 32, 1)
    return dict(w1=w1, b1=b1, w2=w2, b2=b2, wa=wa, ba=ba, wv=wv, bv=bv)


def _reference_evaluate(state, action, p):
    """Pure-JAX reference of ActorCritic.evaluate (PyTorch semantics)."""
    h = jnp.maximum(state @ p["w1"].T + p["b1"], 0.0)
    h = jnp.maximum(h @ p["w2"].T + p["b2"], 0.0)
    logits = h @ p["wa"].T + p["ba"]
    probs0 = jax.nn.softmax(logits, axis=0)                    # Softmax(dim=0)
    probs = probs0 / probs0.sum(-1, keepdims=True)             # Categorical re-norm
    logp_all = jnp.log(probs)
    lp = jnp.take_along_axis(logp_all, action[:, None].astype(jnp.int32), axis=-1)[:, 0]
    ent = -(probs * logp_all).sum(-1)
    val = (h @ p["wv"].T + p["bv"])[:, 0]
    return lp, val, ent


# TODO(synk): chose_action()'s Categorical.sample() (stochastic) and the python-side
# memory list appends are host/control logic, not implemented in the kernel.

if __name__ == "__main__":
    key = jax.random.PRNGKey(0)
    kp, ks, ka = jax.random.split(key, 3)
    params = init_params(kp)

    # Small demo batch: exercises the single-kernel fast path (nb == 1).
    B = 8
    state = jax.random.normal(ks, (B, 4), dtype=jnp.float32)
    action = jax.random.randint(ka, (B,), 0, 2, dtype=jnp.int32)

    logp, value, entropy = actor_critic_evaluate(state, action, params)
    jax.block_until_ready((logp, value, entropy))

    ref_lp, ref_v, ref_e = _reference_evaluate(state, action, params)
    assert jnp.allclose(logp, ref_lp, atol=2e-5, rtol=2e-5), (logp, ref_lp)
    assert jnp.allclose(value, ref_v, atol=2e-5, rtol=2e-5), (value, ref_v)
    assert jnp.allclose(entropy, ref_e, atol=2e-5, rtol=2e-5), (entropy, ref_e)

    # Multi-tile path: exercises the two-phase batch-dim softmax reduction, the
    # z hand-off, the last-tile-only padding mask, and the parallel phase-1 grid.
    B2 = 300
    ks2, ka2 = jax.random.split(jax.random.PRNGKey(1))
    state2 = jax.random.normal(ks2, (B2, 4), dtype=jnp.float32)
    action2 = jax.random.randint(ka2, (B2,), 0, 2, dtype=jnp.int32)
    logp2, value2, entropy2 = actor_critic_evaluate(state2, action2, params, tile_b=128)
    jax.block_until_ready((logp2, value2, entropy2))

    r_lp2, r_v2, r_e2 = _reference_evaluate(state2, action2, params)
    assert jnp.allclose(logp2, r_lp2, atol=2e-5, rtol=2e-5)
    assert jnp.allclose(value2, r_v2, atol=2e-5, rtol=2e-5)
    assert jnp.allclose(entropy2, r_e2, atol=2e-5, rtol=2e-5)

    print("KERNEL_OK")
</pallas_src>

<mosaic_0001>
module attributes {stable_mosaic.version = 11 : i64} {
  func.func @_fused_kernel(%arg0: i32, %arg1: memref<8x128xf32, #tpu.memory_space<vmem>>, %arg2: memref<1x128xi32, #tpu.memory_space<vmem>>, %arg3: memref<104x128xf32, #tpu.memory_space<vmem>>, %arg4: memref<3x128xf32, #tpu.memory_space<vmem>>) attributes {dimension_semantics = [#tpu.dimension_semantics<arbitrary>], iteration_bounds = array<i64: 1>, scalar_prefetch = 0 : i64, scratch_operands = 0 : i64, tpu.core_type = #tpu.core_type<tc>, window_params = [{pipeline_mode = #tpu.pipeline_mode<synchronous>, transform_indices = @transform_0, window_bounds = array<i64: 8, 128>}, {pipeline_mode = #tpu.pipeline_mode<synchronous>, transform_indices = @transform_1, window_bounds = array<i64: 1, 128>}, {pipeline_mode = #tpu.pipeline_mode<synchronous>, transform_indices = @transform_2, window_bounds = array<i64: 104, 128>}, {pipeline_mode = #tpu.pipeline_mode<synchronous>, transform_indices = @transform_3, window_bounds = array<i64: 3, 128>}]} {
    %c0 = arith.constant 0 : index
    %c0_0 = arith.constant 0 : index
    %0 = vector.load %arg3[%c0, %c0_0] : memref<104x128xf32, #tpu.memory_space<vmem>>, vector<64x8xf32>
    %c0_1 = arith.constant 0 : index
    %c8 = arith.constant 8 : index
    %1 = vector.load %arg3[%c0_1, %c8] : memref<104x128xf32, #tpu.memory_space<vmem>>, vector<64x1xf32>
    %c64 = arith.constant 64 : index
    %c0_2 = arith.constant 0 : index
    %2 = vector.load %arg3[%c64, %c0_2] : memref<104x128xf32, #tpu.memory_space<vmem>>, vector<32x64xf32>
    %c64_3 = arith.constant 64 : index
    %c64_4 = arith.constant 64 : index
    %3 = vector.load %arg3[%c64_3, %c64_4] : memref<104x128xf32, #tpu.memory_space<vmem>>, vector<32x1xf32>
    %c96 = arith.constant 96 : index
    %c0_5 = arith.constant 0 : index
    %4 = vector.load %arg3[%c96, %c0_5] : memref<104x128xf32, #tpu.memory_space<vmem>>, vector<3x32xf32>
    %c96_6 = arith.constant 96 : index
    %c32 = arith.constant 32 : index
    %5 = vector.load %arg3[%c96_6, %c32] : memref<104x128xf32, #tpu.memory_space<vmem>>, vector<3x1xf32>
    %c0_7 = arith.constant 0 : index
    %c0_8 = arith.constant 0 : index
    %6 = vector.load %arg1[%c0_7, %c0_8] : memref<8x128xf32, #tpu.memory_space<vmem>>, vector<8x128xf32>
    %cst = arith.constant dense<0.000000e+00> : vector<64x128xf32>
    %7 = tpu.matmul %0, %6, %cst {dimension_numbers = #tpu.dot_dimension_numbers<[1], [0], [0], [1], [0, 0, 1, 1], [], []>} : vector<64x8xf32>, vector<8x128xf32>, vector<64x128xf32> -> vector<64x128xf32>
    %8 = vector.broadcast %1 : vector<64x1xf32> to vector<64x128xf32>
    %9 = arith.addf %7, %8 : vector<64x128xf32>
    %cst_9 = arith.constant 0.000000e+00 : f32
    %10 = vector.broadcast %cst_9 : f32 to vector<64x128xf32>
    %11 = arith.maximumf %9, %10 : vector<64x128xf32>
    %cst_10 = arith.constant dense<0.000000e+00> : vector<32x128xf32>
    %12 = tpu.matmul %2, %11, %cst_10 {dimension_numbers = #tpu.dot_dimension_numbers<[1], [0], [0], [1], [0, 0, 1, 1], [], []>} : vector<32x64xf32>, vector<64x128xf32>, vector<32x128xf32> -> vector<32x128xf32>
    %13 = vector.broadcast %3 : vector<32x1xf32> to vector<32x128xf32>
    %14 = arith.addf %12, %13 : vector<32x128xf32>
    %cst_11 = arith.constant 0.000000e+00 : f32
    %15 = vector.broadcast %cst_11 : f32 to vector<32x128xf32>
    %16 = arith.maximumf %14, %15 : vector<32x128xf32>
    %cst_12 = arith.constant dense<0.000000e+00> : vector<3x128xf32>
    %17 = tpu.matmul %4, %16, %cst_12 {dimension_numbers = #tpu.dot_dimension_numbers<[1], [0], [0], [1], [0, 0, 1, 1], [], []>} : vector<3x32xf32>, vector<32x128xf32>, vector<3x128xf32> -> vector<3x128xf32>
    %18 = vector.broadcast %5 : vector<3x1xf32> to vector<3x128xf32>
    %19 = arith.addf %17, %18 : vector<3x128xf32>
    %20 = vector.extract_strided_slice %19 {offsets = [0, 0], sizes = [2, 128], strides = [1, 1]} : vector<3x128xf32> to vector<2x128xf32>
    %21 = tpu.iota {dimensions = array<i32: 1>} : vector<1x128xi32>
    %c8_i32 = arith.constant 8 : i32
    %22 = vector.broadcast %c8_i32 : i32 to vector<1x128xi32>
    %23 = arith.cmpi slt, %21, %22 : vector<1x128xi32>
    %cst_13 = arith.constant 0xFF800000 : f32
    %24 = vector.shape_cast %23 : vector<1x128xi1> to vector<1x128xi1>
    %25 = vector.broadcast %24 : vector<1x128xi1> to vector<2x128xi1>
    %26 = vector.broadcast %cst_13 : f32 to vector<2x128xf32>
    %27 = arith.select %25, %20, %26 : vector<2x128xi1>, vector<2x128xf32>
    %cst_14 = arith.constant dense<0xFF800000> : vector<2xf32>
    %28 = vector.multi_reduction <maximumf>, %27, %cst_14 [1] : vector<2x128xf32> to vector<2xf32>
    %29 = vector.shape_cast %28 : vector<2xf32> to vector<2x1xf32>
    %30 = vector.broadcast %29 : vector<2x1xf32> to vector<2x128xf32>
    %31 = arith.subf %20, %30 : vector<2x128xf32>
    %32 = math.exp %31 : vector<2x128xf32>
    %cst_15 = arith.constant 0.000000e+00 : f32
    %33 = vector.shape_cast %23 : vector<1x128xi1> to vector<1x128xi1>
    %34 = vector.broadcast %33 : vector<1x128xi1> to vector<2x128xi1>
    %35 = vector.broadcast %cst_15 : f32 to vector<2x128xf32>
    %36 = arith.select %34, %32, %35 : vector<2x128xi1>, vector<2x128xf32>
    %cst_16 = arith.constant dense<0.000000e+00> : vector<2xf32>
    %37 = vector.multi_reduction <add>, %36, %cst_16 [1] : vector<2x128xf32> to vector<2xf32>
    %38 = vector.shape_cast %37 : vector<2xf32> to vector<2x1xf32>
    %39 = math.log %38 : vector<2x1xf32>
    %40 = arith.addf %29, %39 : vector<2x1xf32>
    %c0_17 = arith.constant 0 : index
    %c0_18 = arith.constant 0 : index
    %41 = vector.load %arg2[%c0_17, %c0_18] : memref<1x128xi32, #tpu.memory_space<vmem>>, vector<1x128xi32>
    %42 = vector.extract_strided_slice %19 {offsets = [0, 0], sizes = [2, 128], strides = [1, 1]} : vector<3x128xf32> to vector<2x128xf32>
    %43 = vector.broadcast %40 : vector<2x1xf32> to vector<2x128xf32>
    %44 = arith.subf %42, %43 : vector<2x128xf32>
    %45 = vector.extract_strided_slice %44 {offsets = [0, 0], sizes = [1, 128], strides = [1, 1]} : vector<2x128xf32> to vector<1x128xf32>
    %46 = vector.extract_strided_slice %44 {offsets = [1, 0], sizes = [1, 128], strides = [1, 1]} : vector<2x128xf32> to vector<1x128xf32>
    %47 = arith.maximumf %45, %46 : vector<1x128xf32>
    %48 = arith.subf %45, %47 : vector<1x128xf32>
    %49 = math.exp %48 : vector<1x128xf32>
    %50 = arith.subf %46, %47 : vector<1x128xf32>
    %51 = math.exp %50 : vector<1x128xf32>
    %52 = arith.addf %49, %51 : vector<1x128xf32>
    %53 = math.log %52 : vector<1x128xf32>
    %54 = arith.addf %47, %53 : vector<1x128xf32>
    %55 = arith.subf %45, %54 : vector<1x128xf32>
    %56 = arith.subf %46, %54 : vector<1x128xf32>
    %57 = tpu.reciprocal %52 : vector<1x128xf32> -> vector<1x128xf32>
    %58 = arith.mulf %49, %57 : vector<1x128xf32>
    %59 = arith.mulf %51, %57 : vector<1x128xf32>
    %c1_i32 = arith.constant 1 : i32
    %60 = vector.broadcast %c1_i32 : i32 to vector<1x128xi32>
    %61 = arith.cmpi eq, %41, %60 : vector<1x128xi32>
    %62 = arith.select %61, %56, %55 : vector<1x128xi1>, vector<1x128xf32>
    %cst_19 = arith.constant 0.000000e+00 : f32
    %63 = vector.broadcast %cst_19 : f32 to vector<1x128xf32>
    %64 = arith.cmpf ogt, %58, %63 : vector<1x128xf32>
    %65 = arith.mulf %58, %55 : vector<1x128xf32>
    %cst_20 = arith.constant 0.000000e+00 : f32
    %66 = vector.broadcast %cst_20 : f32 to vector<1x128xf32>
    %67 = arith.select %64, %65, %66 : vector<1x128xi1>, vector<1x128xf32>
    %cst_21 = arith.constant 0.000000e+00 : f32
    %68 = vector.broadcast %cst_21 : f32 to vector<1x128xf32>
    %69 = arith.cmpf ogt, %59, %68 : vector<1x128xf32>
    %70 = arith.mulf %59, %56 : vector<1x128xf32>
    %cst_22 = arith.constant 0.000000e+00 : f32
    %71 = vector.broadcast %cst_22 : f32 to vector<1x128xf32>
    %72 = arith.select %69, %70, %71 : vector<1x128xi1>, vector<1x128xf32>
    %73 = arith.addf %67, %72 : vector<1x128xf32>
    %cst_23 = arith.constant 0.000000e+00 : f32
    %74 = vector.broadcast %cst_23 : f32 to vector<1x128xf32>
    %75 = arith.subf %74, %73 : vector<1x128xf32>
    %76 = vector.extract_strided_slice %19 {offsets = [2, 0], sizes = [1, 128], strides = [1, 1]} : vector<3x128xf32> to vector<1x128xf32>
    %77 = tpu.concatenate %62, %76, %75 in 0 : vector<1x128xf32>, vector<1x128xf32>, vector<1x128xf32> -> vector<3x128xf32>
    %c0_24 = arith.constant 0 : index
    %c0_25 = arith.constant 0 : index
    %78 = vector.load %arg4[%c0_24, %c0_25] : memref<3x128xf32, #tpu.memory_space<vmem>>, vector<3x128xf32>
    tpu.vector_store %arg4[%c0_24, %c0_25], %77 {strides = array<i32>} : memref<3x128xf32, #tpu.memory_space<vmem>>, vector<3x128xf32>,
    return
  }
  func.func @transform_0(%arg0: i32) -> (i32, i32) {
    %c0_i32 = arith.constant 0 : i32
    %c0_i32_0 = arith.constant 0 : i32
    %c0_i32_1 = arith.constant 0 : i32
    return %c0_i32, %c0_i32_0 : i32, i32
  }
  func.func @transform_1(%arg0: i32) -> (i32, i32) {
    %c0_i32 = arith.constant 0 : i32
    %c0_i32_0 = arith.constant 0 : i32
    %c0_i32_1 = arith.constant 0 : i32
    return %c0_i32, %c0_i32_0 : i32, i32
  }
  func.func @transform_2(%arg0: i32) -> (i32, i32) {
    %c0_i32 = arith.constant 0 : i32
    %c0_i32_0 = arith.constant 0 : i32
    %c0_i32_1 = arith.constant 0 : i32
    return %c0_i32, %c0_i32_0 : i32, i32
  }
  func.func @transform_3(%arg0: i32) -> (i32, i32) {
    %c0_i32 = arith.constant 0 : i32
    %c0_i32_0 = arith.constant 0 : i32
    %c0_i32_1 = arith.constant 0 : i32
    return %c0_i32, %c0_i32_0 : i32, i32
  }
}

</mosaic_0001>

<llo_original>
// kernel: tpu_custom_call.1
$region0: #{tpu_custom_call.1}
  #allocation0 [shape = 'u32[]', space=smem, size = 0x4, offset = 0x4, fixed_abs, tag = 'smem constant byte address 0x4 - core index']
  #allocation1 [shape = 'u32[144,128]{1,0:T(1,128)}', space=vmem, size = 0x12000, scoped, tag = 'internal scratch']
  %s0 = inlined_call_operand.hbm [shape: f32[8,128], index: 0, kind: input, shape index: {}]
  %s1 = inlined_call_operand.vmem [shape: s32[1,128], index: 1, kind: input, shape index: {}]
  %s2 = inlined_call_operand.hbm [shape: f32[104,128], index: 2, kind: input, shape index: {}]
  %s3 = inlined_call_operand.hbm [shape: f32[3,128], index: 3, kind: output, shape index: {}]
  %s4 = sld [smem:[#allocation0]]
  $region30: #{tpu_custom_call.1} parent=0
    _
  %s6 = ssub.s32 1, %s4
  %s7 = scalar_select 0, %s6, %s4
  $region1: #{tpu_custom_call.1} parent=0
    #allocation2 [shape = 'u8[4096]{0}', space=vmem, size = 0x1000, scoped, tag = 'input window, operand 0, single buffered']
    #allocation3 [shape = 's32[1]{0}', space=sflag, size = 0x4, scoped, tag = 'scoped memory for tpu_custom_call.1']
    #allocation4 [shape = 's32[1]{0}', space=sflag, size = 0x4, scoped, tag = 'scoped memory for tpu_custom_call.1']
    #allocation5 [shape = 'u8[53248]{0}', space=vmem, size = 0xd000, scoped, tag = 'input window, operand 2, single buffered']
    #allocation6 [shape = 's32[1]{0}', space=sflag, size = 0x4, scoped, tag = 'scoped memory for tpu_custom_call.1']
    #allocation7 [shape = 'u8[2048]{0}', space=vmem, size = 0x800, scoped, tag = 'output window, operand 0, single buffered']
    %8 = vsyncpa [#allocation3], 0
    %9 = vsyncpa [#allocation6], 0
    %10 = vsyncpa [#allocation4], 0
    // Predicated region
    $region2: #{tpu_custom_call.1} parent=1 // pred_check
      _
    $region3: #{tpu_custom_call.1} parent=1 // pred_check_branch
      %12 = sbr.rel (0) target = $region5
    $region4: #{tpu_custom_call.1} parent=1 // pred_region
      %s14 = ssub.s32 128, 128
      %15 = vsyncadd [#allocation3], %s14
      %s17 = sshll.u32 [#allocation2], 4
      %s18 = int_to_ptr.vmem [resolvable:$true] %s17
      %20 = dma.hbm_to_vmem [thread:$0]  %s0, 128, %s18, [#allocation3]
    $region5: #{tpu_custom_call.1} parent=1 // pred_fallthru
      _
    // Predicated region
    $region6: #{tpu_custom_call.1} parent=1 // pred_check
      _
    $region7: #{tpu_custom_call.1} parent=1 // pred_check_branch
      %22 = sbr.rel (0) target = $region9
    $region8: #{tpu_custom_call.1} parent=1 // pred_region
      _
    $region9: #{tpu_custom_call.1} parent=1 // pred_fallthru
      _
    // Predicated region
    $region10: #{tpu_custom_call.1} parent=1 // pred_check
      _
    $region11: #{tpu_custom_call.1} parent=1 // pred_check_branch
      %24 = sbr.rel (0) target = $region13
    $region12: #{tpu_custom_call.1} parent=1 // pred_region
      %s26 = ssub.s32 1664, 1664
      %27 = vsyncadd [#allocation6], %s26
      %s28 = sshll.u32 [#allocation5], 4
      %s29 = int_to_ptr.vmem [resolvable:$true] %s28
      %34 = dma.hbm_to_vmem [thread:$0]  %s2, 1664, %s29, [#allocation6], 128, 128, 8
    $region13: #{tpu_custom_call.1} parent=1 // pred_fallthru
      _
    // Predicated region
    $region14: #{tpu_custom_call.1} parent=1 // pred_check
      _
    $region15: #{tpu_custom_call.1} parent=1 // pred_check_branch
      %36 = sbr.rel (0) target = $region17
    $region16: #{tpu_custom_call.1} parent=1 // pred_region
      %37 = dma.done [#allocation3], 128
    $region17: #{tpu_custom_call.1} parent=1 // pred_fallthru
      _
    // Predicated region
    $region18: #{tpu_custom_call.1} parent=1 // pred_check
      _
    $region19: #{tpu_custom_call.1} parent=1 // pred_check_branch
      %39 = sbr.rel (0) target = $region21
    $region20: #{tpu_custom_call.1} parent=1 // pred_region
      %40 = dma.done [#allocation6], 1664
    $region21: #{tpu_custom_call.1} parent=1 // pred_fallthru
      _
    %v41 = vld [vmem:[#allocation5] sm:$0xff]
    %v42 = vld [vmem:[#allocation5 + $0x8] sm:$0xff]
    %v43 = vld [vmem:[#allocation5 + $0x10] sm:$0xff]
    %v44 = vld [vmem:[#allocation5 + $0x18] sm:$0xff]
    %v45 = vld [vmem:[#allocation5 + $0x20] sm:$0xff]
    %v46 = vld [vmem:[#allocation5 + $0x28] sm:$0xff]
    %v47 = vld [vmem:[#allocation5 + $0x30] sm:$0xff]
    %v48 = vld [vmem:[#allocation5 + $0x38] sm:$0xff]
    %v49 = vld [vmem:[#allocation5 + $0x40] sm:$0xff]
    %v50 = vld [vmem:[#allocation5 + $0x48] sm:$0xff]
    %v51 = vld [vmem:[#allocation5 + $0x50] sm:$0xff]
    %v52 = vld [vmem:[#allocation5 + $0x58] sm:$0xff]
    %v53 = vld [vmem:[#allocation5 + $0x60] sm:$0x7]
    %v54 = vld [vmem:[#allocation2] sm:$0xff]
    %56 = vset.pattern.permute.xlu0 8
    %57 = vperm.xlu0 %56, %v41
    %v58 = vpop.permute.xlu0 %57
    %61 = vset.pattern.permute.xlu0 8
    %62 = vperm.xlu0 %61, %v42
    %v63 = vpop.permute.xlu0 %62
    %66 = vset.pattern.permute.xlu0 8
    %67 = vperm.xlu0 %66, %v43
    %v68 = vpop.permute.xlu0 %67
    %71 = vset.pattern.permute.xlu0 8
    %72 = vperm.xlu0 %71, %v44
    %v73 = vpop.permute.xlu0 %72
    %76 = vset.pattern.permute.xlu0 8
    %77 = vperm.xlu0 %76, %v45
    %v78 = vpop.permute.xlu0 %77
    %81 = vset.pattern.permute.xlu0 8
    %82 = vperm.xlu0 %81, %v46
    %v83 = vpop.permute.xlu0 %82
    %86 = vset.pattern.permute.xlu0 8
    %87 = vperm.xlu0 %86, %v47
    %v88 = vpop.permute.xlu0 %87
    %91 = vset.pattern.permute.xlu0 8
    %92 = vperm.xlu0 %91, %v48
    %v93 = vpop.permute.xlu0 %92
    %vm95 = vcmask 64512
    %v96 = vsel %vm95, %v41, 0
    %v98 = vsel %vm95, %v42, 0
    %v100 = vsel %vm95, %v43, 0
    %v102 = vsel %vm95, %v44, 0
    %v104 = vsel %vm95, %v45, 0
    %v106 = vsel %vm95, %v46, 0
    %v108 = vsel %vm95, %v47, 0
    %v110 = vsel %vm95, %v48, 0
    %112 = vmatprep.subr.mxu0 0.0
    %113 = vmatpush1.msra.mxu0 %v54
    %114 = vmatprep.subr.mxu0 0.0
    %115 = vmatpush1.msra.mxu0 0.0
    %116 = vmatprep.subr.mxu0 0.0
    %117 = vmatpush1.msra.mxu0 0.0
    %118 = vmatprep.subr.mxu0 0.0
    %119 = vmatpush1.msra.mxu0 0.0
    %120 = vmatprep.subr.mxu0 0.0
    %121 = vmatpush1.msra.mxu0 0.0
    %122 = vmatprep.subr.mxu0 0.0
    %123 = vmatpush1.msra.mxu0 0.0
    %124 = vmatprep.subr.mxu0 0.0
    %125 = vmatpush1.msra.mxu0 0.0
    %126 = vmatprep.subr.mxu0 0.0
    %127 = vmatpush1.msra.mxu0 0.0
    %128 = vmatprep.subr.mxu0 0.0
    %129 = vmatpush1.msra.mxu0 0.0
    %130 = vmatprep.subr.mxu0 0.0
    %131 = vmatpush1.msra.mxu0 0.0
    %132 = vmatprep.subr.mxu0 0.0
    %133 = vmatpush1.msra.mxu0 0.0
    %134 = vmatprep.subr.mxu0 0.0
    %135 = vmatpush1.msra.mxu0 0.0
    %136 = vmatprep.subr.mxu0 0.0
    %137 = vmatpush1.msra.mxu0 0.0
    %138 = vmatprep.subr.mxu0 0.0
    %139 = vmatpush1.msra.mxu0 0.0
    %140 = vmatprep.subr.mxu0 0.0
    %141 = vmatpush1.msra.mxu0 0.0
    %142 = vmatprep.subr.mxu0 0.0
    %143 = vmatpush1.msra.mxu0 0.0
    %144 = vmatprep.subr.mxu0 0.0
    %145 = vmatpush1.msra.mxu0 0.0
    %146 = vmatprep.subr.mxu0 0.0
    %147 = vmatpush1.msra.mxu0 0.0
    %148 = vmatprep.subr.mxu0 0.0
    %149 = vmatpush1.msra.mxu0 0.0
    %150 = vmatprep.subr.mxu0 0.0
    %151 = vmatpush1.msra.mxu0 0.0
    %152 = vmatprep.subr.mxu0 0.0
    %153 = vmatpush1.msra.mxu0 0.0
    %154 = vmatprep.subr.mxu0 0.0
    %155 = vmatpush1.msra.mxu0 0.0
    %156 = vmatprep.subr.mxu0 0.0
    %157 = vmatpush1.msra.mxu0 0.0
    %158 = vmatprep.subr.mxu0 0.0
    %159 = vmatpush1.msra.mxu0 0.0
    %160 = vmatprep.subr.mxu0 0.0
    %161 = vmatpush1.msra.mxu0 0.0
    %162 = vmatprep.subr.mxu0 0.0
    %163 = vmatpush1.msra.mxu0 0.0
    %164 = vmatprep.subr.mxu0 0.0
    %165 = vmatpush1.msra.mxu0 0.0
    %166 = vmatprep.subr.mxu0 0.0
    %167 = vmatpush1.msra.mxu0 0.0
    %168 = vmatprep.subr.mxu0 0.0
    %169 = vmatpush1.msra.mxu0 0.0
    %170 = vmatprep.subr.mxu0 0.0
    %171 = vmatpush1.msra.mxu0 0.0
    %172 = vmatprep.subr.mxu0 0.0
    %173 = vmatpush1.msra.mxu0 0.0
    %174 = vmatprep.subr.mxu0 0.0
    %175 = vmatpush1.msra.mxu0 0.0
    %176 = vmatprep.mubr.f32.mxu0 0.0
    %177 = vmatmul.mubr.f32.gmra.mrb[0].mxu0 %v96
    %v178 = vpop.f32.mrb[0].mxu0
    %v179 = vadd.f32 %v58, %v178
    %v180 = vpop.f32.mrb[0].mxu0
    %181 = vmatprep.mubr.f32.mxu0 0.0
    %182 = vmatmul.mubr.f32.gmra.mrb[0].mxu0 %v98
    %v183 = vpop.f32.mrb[0].mxu0
    %v184 = vadd.f32 %v63, %v183
    %v185 = vpop.f32.mrb[0].mxu0
    %186 = vmatprep.mubr.f32.mxu0 0.0
    %187 = vmatmul.mubr.f32.gmra.mrb[0].mxu0 %v100
    %v188 = vpop.f32.mrb[0].mxu0
    %v189 = vadd.f32 %v68, %v188
    %v190 = vpop.f32.mrb[0].mxu0
    %191 = vmatprep.mubr.f32.mxu0 0.0
    %192 = vmatmul.mubr.f32.gmra.mrb[0].mxu0 %v102
    %v193 = vpop.f32.mrb[0].mxu0
    %v194 = vadd.f32 %v73, %v193
    %v195 = vpop.f32.mrb[0].mxu0
    %196 = vmatprep.mubr.f32.mxu0 0.0
    %197 = vmatmul.mubr.f32.gmra.mrb[0].mxu0 %v104
    %v198 = vpop.f32.mrb[0].mxu0
    %v199 = vadd.f32 %v78, %v198
    %v200 = vpop.f32.mrb[0].mxu0
    %201 = vmatprep.mubr.f32.mxu0 0.0
    %202 = vmatmul.mubr.f32.gmra.mrb[0].mxu0 %v106
    %v203 = vpop.f32.mrb[0].mxu0
    %v204 = vadd.f32 %v83, %v203
    %v205 = vpop.f32.mrb[0].mxu0
    %206 = vmatprep.mubr.f32.mxu0 0.0
    %207 = vmatmul.mubr.f32.gmra.mrb[0].mxu0 %v108
    %v208 = vpop.f32.mrb[0].mxu0
    %v209 = vadd.f32 %v88, %v208
    %v210 = vpop.f32.mrb[0].mxu0
    %211 = vmatprep.mubr.f32.mxu0 0.0
    %212 = vmatmul.mubr.f32.gmra.mrb[0].mxu0 %v110
    %v213 = vpop.f32.mrb[0].mxu0
    %v214 = vadd.f32 %v93, %v213
    %v215 = vpop.f32.mrb[0].mxu0
    %216 = vdwg.mxu0
    %v217 = vmax.f32 %v179, 0.0
    %v218 = vmax.f32 %v184, 0.0
    %v219 = vmax.f32 %v189, 0.0
    %v220 = vmax.f32 %v194, 0.0
    %v221 = vmax.f32 %v199, 0.0
    %v222 = vmax.f32 %v204, 0.0
    %v223 = vmax.f32 %v209, 0.0
    %v224 = vmax.f32 %v214, 0.0
    %226 = vset.pattern.permute.xlu0 64
    %227 = vperm.xlu0 %226, %v49
    %v228 = vpop.permute.xlu0 %227
    %231 = vset.pattern.permute.xlu0 64
    %232 = vperm.xlu0 %231, %v50
    %v233 = vpop.permute.xlu0 %232
    %236 = vset.pattern.permute.xlu0 64
    %237 = vperm.xlu0 %236, %v51
    %v238 = vpop.permute.xlu0 %237
    %241 = vset.pattern.permute.xlu0 64
    %242 = vperm.xlu0 %241, %v52
    %v243 = vpop.permute.xlu0 %242
    %vm245 = vcmask 523264
    %v246 = vsel %vm245, %v49, 0
    %v248 = vsel %vm245, %v50, 0
    %v250 = vsel %vm245, %v51, 0
    %v252 = vsel %vm245, %v52, 0
    %254 = vmatprep.subr.mxu0 0.0
    %255 = vmatpush1.msra.mxu0 %v217
    %256 = vmatprep.subr.mxu0 0.0
    %257 = vmatpush1.msra.mxu0 %v218
    %258 = vmatprep.subr.mxu0 0.0
    %259 = vmatpush1.msra.mxu0 %v219
    %260 = vmatprep.subr.mxu0 0.0
    %261 = vmatpush1.msra.mxu0 %v220
    %262 = vmatprep.subr.mxu0 0.0
    %263 = vmatpush1.msra.mxu0 %v221
    %264 = vmatprep.subr.mxu0 0.0
    %265 = vmatpush1.msra.mxu0 %v222
    %266 = vmatprep.subr.mxu0 0.0
    %267 = vmatpush1.msra.mxu0 %v223
    %268 = vmatprep.subr.mxu0 0.0
    %269 = vmatpush1.msra.mxu0 %v224
    %270 = vmatprep.subr.mxu0 0.0
    %271 = vmatpush1.msra.mxu0 0.0
    %272 = vmatprep.subr.mxu0 0.0
    %273 = vmatpush1.msra.mxu0 0.0
    %274 = vmatprep.subr.mxu0 0.0
    %275 = vmatpush1.msra.mxu0 0.0
    %276 = vmatprep.subr.mxu0 0.0
    %277 = vmatpush1.msra.mxu0 0.0
    %278 = vmatprep.subr.mxu0 0.0
    %279 = vmatpush1.msra.mxu0 0.0
    %280 = vmatprep.subr.mxu0 0.0
    %281 = vmatpush1.msra.mxu0 0.0
    %282 = vmatprep.subr.mxu0 0.0
    %283 = vmatpush1.msra.mxu0 0.0
    %284 = vmatprep.subr.mxu0 0.0
    %285 = vmatpush1.msra.mxu0 0.0
    %286 = vmatprep.subr.mxu0 0.0
    %287 = vmatpush1.msra.mxu0 0.0
    %288 = vmatprep.subr.mxu0 0.0
    %289 = vmatpush1.msra.mxu0 0.0
    %290 = vmatprep.subr.mxu0 0.0
    %291 = vmatpush1.msra.mxu0 0.0
    %292 = vmatprep.subr.mxu0 0.0
    %293 = vmatpush1.msra.mxu0 0.0
    %294 = vmatprep.subr.mxu0 0.0
    %295 = vmatpush1.msra.mxu0 0.0
    %296 = vmatprep.subr.mxu0 0.0
    %297 = vmatpush1.msra.mxu0 0.0
    %298 = vmatprep.subr.mxu0 0.0
    %299 = vmatpush1.msra.mxu0 0.0
    %300 = vmatprep.subr.mxu0 0.0
    %301 = vmatpush1.msra.mxu0 0.0
    %302 = vmatprep.subr.mxu0 0.0
    %303 = vmatpush1.msra.mxu0 0.0
    %304 = vmatprep.subr.mxu0 0.0
    %305 = vmatpush1.msra.mxu0 0.0
    %306 = vmatprep.subr.mxu0 0.0
    %307 = vmatpush1.msra.mxu0 0.0
    %308 = vmatprep.subr.mxu0 0.0
    %309 = vmatpush1.msra.mxu0 0.0
    %310 = vmatprep.subr.mxu0 0.0
    %311 = vmatpush1.msra.mxu0 0.0
    %312 = vmatprep.subr.mxu0 0.0
    %313 = vmatpush1.msra.mxu0 0.0
    %314 = vmatprep.subr.mxu0 0.0
    %315 = vmatpush1.msra.mxu0 0.0
    %316 = vmatprep.subr.mxu0 0.0
    %317 = vmatpush1.msra.mxu0 0.0
    %318 = vmatprep.mubr.f32.mxu0 0.0
    %319 = vmatmul.mubr.f32.gmra.mrb[0].mxu0 %v246
    %v320 = vpop.f32.mrb[0].mxu0
    %v321 = vadd.f32 %v228, %v320
    %v322 = vpop.f32.mrb[0].mxu0
    %323 = vmatprep.mubr.f32.mxu0 0.0
    %324 = vmatmul.mubr.f32.gmra.mrb[0].mxu0 %v248
    %v325 = vpop.f32.mrb[0].mxu0
    %v326 = vadd.f32 %v233, %v325
    %v327 = vpop.f32.mrb[0].mxu0
    %328 = vmatprep.mubr.f32.mxu0 0.0
    %329 = vmatmul.mubr.f32.gmra.mrb[0].mxu0 %v250
    %v330 = vpop.f32.mrb[0].mxu0
    %v331 = vadd.f32 %v238, %v330
    %v332 = vpop.f32.mrb[0].mxu0
    %333 = vmatprep.mubr.f32.mxu0 0.0
    %334 = vmatmul.mubr.f32.gmra.mrb[0].mxu0 %v252
    %v335 = vpop.f32.mrb[0].mxu0
    %v336 = vadd.f32 %v243, %v335
    %v337 = vpop.f32.mrb[0].mxu0
    %338 = vdwg.mxu0
    %v339 = vmax.f32 %v321, 0.0
    %v340 = vmax.f32 %v326, 0.0
    %v341 = vmax.f32 %v331, 0.0
    %v342 = vmax.f32 %v336, 0.0
    %344 = vset.pattern.permute.xlu0 32
    %345 = vperm.xlu0 %344, %v53
    %v346 = vpop.permute.xlu0 %345
    %vm348 = vcmask 261120
    %v349 = vsel %vm348, %v53, 0
    %351 = vmatprep.subr.mxu0 0.0
    %352 = vmatpush1.msra.mxu0 %v339
    %353 = vmatprep.subr.mxu0 0.0
    %354 = vmatpush1.msra.mxu0 %v340
    %355 = vmatprep.subr.mxu0 0.0
    %356 = vmatpush1.msra.mxu0 %v341
    %357 = vmatprep.subr.mxu0 0.0
    %358 = vmatpush1.msra.mxu0 %v342
    %359 = vmatprep.subr.mxu0 0.0
    %360 = vmatpush1.msra.mxu0 0.0
    %361 = vmatprep.subr.mxu0 0.0
    %362 = vmatpush1.msra.mxu0 0.0
    %363 = vmatprep.subr.mxu0 0.0
    %364 = vmatpush1.msra.mxu0 0.0
    %365 = vmatprep.subr.mxu0 0.0
    %366 = vmatpush1.msra.mxu0 0.0
    %367 = vmatprep.subr.mxu0 0.0
    %368 = vmatpush1.msra.mxu0 0.0
    %369 = vmatprep.subr.mxu0 0.0
    %370 = vmatpush1.msra.mxu0 0.0
    %371 = vmatprep.subr.mxu0 0.0
    %372 = vmatpush1.msra.mxu0 0.0
    %373 = vmatprep.subr.mxu0 0.0
    %374 = vmatpush1.msra.mxu0 0.0
    %375 = vmatprep.subr.mxu0 0.0
    %376 = vmatpush1.msra.mxu0 0.0
    %377 = vmatprep.subr.mxu0 0.0
    %378 = vmatpush1.msra.mxu0 0.0
    %379 = vmatprep.subr.mxu0 0.0
    %380 = vmatpush1.msra.mxu0 0.0
    %381 = vmatprep.subr.mxu0 0.0
    %382 = vmatpush1.msra.mxu0 0.0
    %383 = vmatprep.subr.mxu0 0.0
    %384 = vmatpush1.msra.mxu0 0.0
    %385 = vmatprep.subr.mxu0 0.0
    %386 = vmatpush1.msra.mxu0 0.0
    %387 = vmatprep.subr.mxu0 0.0
    %388 = vmatpush1.msra.mxu0 0.0
    %389 = vmatprep.subr.mxu0 0.0
    %390 = vmatpush1.msra.mxu0 0.0
    %391 = vmatprep.subr.mxu0 0.0
    %392 = vmatpush1.msra.mxu0 0.0
    %393 = vmatprep.subr.mxu0 0.0
    %394 = vmatpush1.msra.mxu0 0.0
    %395 = vmatprep.subr.mxu0 0.0
    %396 = vmatpush1.msra.mxu0 0.0
    %397 = vmatprep.subr.mxu0 0.0
    %398 = vmatpush1.msra.mxu0 0.0
    %399 = vmatprep.subr.mxu0 0.0
    %400 = vmatpush1.msra.mxu0 0.0
    %401 = vmatprep.subr.mxu0 0.0
    %402 = vmatpush1.msra.mxu0 0.0
    %403 = vmatprep.subr.mxu0 0.0
    %404 = vmatpush1.msra.mxu0 0.0
    %405 = vmatprep.subr.mxu0 0.0
    %406 = vmatpush1.msra.mxu0 0.0
    %407 = vmatprep.subr.mxu0 0.0
    %408 = vmatpush1.msra.mxu0 0.0
    %409 = vmatprep.subr.mxu0 0.0
    %410 = vmatpush1.msra.mxu0 0.0
    %411 = vmatprep.subr.mxu0 0.0
    %412 = vmatpush1.msra.mxu0 0.0
    %413 = vmatprep.subr.mxu0 0.0
    %414 = vmatpush1.msra.mxu0 0.0
    %415 = vmatprep.mubr.f32.mxu0 0.0
    %416 = vmatmul.mubr.f32.gmra.mrb[0].mxu0 %v349
    %v417 = vpop.f32.mrb[0].mxu0
    %v418 = vadd.f32 %v346, %v417
    %v419 = vpop.f32.mrb[0].mxu0
    %420 = vdwg.mxu0
    %v421 = vlaneseq
    %v422 = vand.u32 %v421, 127
    %vm423 = vcmp.lt.s32.totalorder %v422, 8
    %v424 = vsel %vm423, 1, 0
    %vm425 = vcmp.eq.s32.totalorder %v424, 1
    %v426 = vsel %vm425, %v418, -inf
    %vm427 = vcmask 1041408
    %v428 = vsel %vm427, %v426, -inf
    %429 = vmax.xlane.f32.xlu0 %v428
    %v430 = vpop.xlane.xlu0 %429
    %v431 = vsub.f32 %v418, %v430
    %v432 = vmul.f32 %v431, 1.442695
    %v433 = vpow.pop %v432
    %v434 = vsel %vm425, %v433, 0.0
    %v435 = vsel %vm427, %v434, 0.0
    %436 = vadd.xlane.f32.xlu0 %v435
    %v437 = vpop.xlane.xlu0 %436
    %v438 = vlog2.pop %v437
    %v439 = vmul.f32 %v438, 0.6931472
    %v440 = vadd.f32 %v430, %v439
    %v441 = vld [vmem:[%s1] sm:$0x1]
    %v442 = vsub.f32 %v418, %v440
    %v444 = vrot.slane %v442, 1
    %v446 = vmax.f32 %v442, %v444
    %v447 = vsub.f32 %v442, %v446
    %v448 = vmul.f32 %v447, 1.442695
    %v449 = vpow.pop %v448
    %v451 = vrot.slane %v446, 7
    %v453 = vsub.f32 %v442, %v451
    %v454 = vmul.f32 %v453, 1.442695
    %v455 = vpow.pop %v454
    %v457 = vrot.slane %v455, 1
    %v459 = vadd.f32 %v449, %v457
    %v460 = vlog2.pop %v459
    %v461 = vmul.f32 %v460, 0.6931472
    %v462 = vadd.f32 %v446, %v461
    %v463 = vsub.f32 %v442, %v462
    %v465 = vrot.slane %v462, 7
    %v467 = vsub.f32 %v442, %v465
    %v468 = vrcp.pop %v459
    %v469 = vmul.f32 %v449, %v468
    %v471 = vrot.slane %v468, 7
    %v473 = vmul.f32 %v455, %v471
    %vm474 = vcmp.eq.s32.totalorder %v441, 1
    %v477 = vunpack.c.l.s4 1966171168
    %v478 = vunpack.c.0.s8 %v477
    %v479 = vlaneseq
    %v480 = vshrl.u32 %v479, 7
    %v481 = vsub.s32 %v478, %v480
    %v482 = vrot.slane %v467, %v481
    %v483 = vcombine.high %v482, %v482
    %v485 = vunpack.c.l.s4 1966171168
    %v486 = vunpack.c.0.s8 %v485
    %v487 = vlaneseq
    %v488 = vshrl.u32 %v487, 7
    %v489 = vsub.s32 %v486, %v488
    %v490 = vrot.slane %v483, %v489
    %v492 = vsel %vm474, %v490, %v463
    %vm493 = vcmp.gt.f32.partialorder %v469, 0.0
    %v494 = vmul.f32 %v469, %v463
    %v495 = vsel %vm493, %v494, 0.0
    %vm496 = vcmp.gt.f32.partialorder %v473, 0.0
    %v497 = vmul.f32 %v473, %v467
    %v498 = vsel %vm496, %v497, 0.0
    %v500 = vrot.slane %v498, 1
    %v502 = vadd.f32 %v495, %v500
    %v503 = vsub.f32 0.0, %v502
    %v505 = vrot.slane %v418, 1
    %v508 = vrot.slane %v503, 6
    %vm510 = vcmask 1040384
    %v511 = vsel %vm510, %v492, %v505
    %v512 = vsel %vm427, %v511, %v508
    %513 = vst [vmem:[#allocation7] sm:$0x7] %v512
    // Predicated region
    $region22: #{tpu_custom_call.1} parent=1 // pred_check
      _
    $region23: #{tpu_custom_call.1} parent=1 // pred_check_branch
      %515 = sbr.rel (0) target = $region25
    $region24: #{tpu_custom_call.1} parent=1 // pred_region
      %s517 = ssub.s32 64, 64
      %518 = vsyncadd [#allocation4], %s517
      %s520 = sshll.u32 [#allocation7], 4
      %s521 = int_to_ptr.vmem [resolvable:$true] %s520
      %523 = dma.vmem_to_hbm [thread:$0]  %s521, 64, %s3, [#allocation4]
    $region25: #{tpu_custom_call.1} parent=1 // pred_fallthru
      _
    // Predicated region
    $region26: #{tpu_custom_call.1} parent=1 // pred_check
      _
    $region27: #{tpu_custom_call.1} parent=1 // pred_check_branch
      %525 = sbr.rel (0) target = $region29
    $region28: #{tpu_custom_call.1} parent=1 // pred_region
      %526 = dma.done [#allocation4], 64
    $region29: #{tpu_custom_call.1} parent=1 // pred_fallthru
      _
    %527 = vsyncpa [#allocation3], 1
    %528 = vsyncpa [#allocation6], 1
    %529 = vsyncpa [#allocation4], 1

</llo_original>
